<compile_context>
chip_gen: v5e
topology: v5e:2x2
jax: 0.10.0
libtpu: 0.0.40
codegen_flags: <defaults>
</compile_context>

<pallas_src>
import math
import functools

import jax
import jax.numpy as jnp
from jax.experimental import pallas as pl
from jax.experimental.pallas import tpu as pltpu


# bf16 is MXU-native on v5e/v6e/v7x; accumulation stays f32.
_MXU_DTYPE = jnp.bfloat16
_WEIGHT_DTYPE = jnp.bfloat16          # weight matrices stored bf16 in HBM
_LN_EPS = 1e-5                        # nn.TransformerEncoderLayer default


def _mm(a, b):
    """a @ b on the MXU with f32 accumulation."""
    return jnp.dot(a.astype(_MXU_DTYPE), b.astype(_MXU_DTYPE),
                   preferred_element_type=jnp.float32)


def _mm_nt(a, b):
    """a @ b.T on the MXU without materializing the transpose."""
    return jax.lax.dot_general(
        a.astype(_MXU_DTYPE), b.astype(_MXU_DTYPE),
        (((1,), (1,)), ((), ())), preferred_element_type=jnp.float32)


def _layernorm(x, gamma, beta, eps):
    """LayerNorm with a single centered pass (x - mean computed once)."""
    mean = jnp.mean(x, axis=-1, keepdims=True)
    xc = x - mean
    var = jnp.mean(xc * xc, axis=-1, keepdims=True)
    return xc * jax.lax.rsqrt(var + eps) * gamma + beta


def _seq_tile(L, max_tile=256):
    """Largest multiple-of-8 tile <= max_tile dividing L (else whole L)."""
    if L % 8 != 0:
        return L
    t = min(max_tile, L)
    t -= t % 8
    while L % t != 0:
        t -= 8
    return t


def _vmem_limit_bytes():
    """Raise the scoped VMEM limit, capped at 7/8 of physical VMEM."""
    try:
        cap = int(pltpu.get_tpu_info().vmem_capacity_bytes)
    except Exception:
        cap = 128 * 1024 * 1024
    return int(min(100 * 1024 * 1024, cap * 7 // 8))


def _const_spec(shape):
    """BlockSpec for a grid-invariant (weight/bias) block: single-buffered."""
    nd = len(shape)
    return pl.BlockSpec(shape, lambda *_: (0,) * nd,
                        pipeline_mode=pl.Buffered(1))


# ------------------------------ Pallas kernels ------------------------------

def _inproj_pe_kernel(x_ref, w_ref, b_ref, pe_ref, o_ref):
    """Input projection with positional-encoding add fused into the epilogue."""
    x = x_ref[0].astype(jnp.float32)                          # (TL, Din)
    y = _mm(x, w_ref[...]) + b_ref[...] + pe_ref[...]
    o_ref[0] = y.astype(o_ref.dtype)


def _encoder_layer_kernel(h_ref, ln1_g_ref, ln1_b_ref, qkv_w_ref, qkv_b_ref,
                          out_w_ref, out_b_ref, ln2_g_ref, ln2_b_ref,
                          w1_ref, b1_ref, w2_ref, b2_ref, o_ref,
                          *, n_head, eps, scale):
    """Fully fused pre-norm encoder layer (attention + FFN, both residuals)."""
    x = h_ref[0].astype(jnp.float32)                          # (L, E)
    E = x.shape[-1]
    Dh = E // n_head

    # --- attention sub-layer: x + W_o @ MHA(LN1(x)) + b_o ---
    ln = _layernorm(x, ln1_g_ref[...], ln1_b_ref[...], eps)
    qkv = _mm(ln, qkv_w_ref[...]) + qkv_b_ref[...]            # (L, 3E), f32
    q_all = qkv[:, :E] * scale        # fold 1/sqrt(Dh) into Q (L*E mults only)
    k_all = qkv[:, E:2 * E]
    v_all = qkv[:, 2 * E:]

    # TODO(synk): for long sequences switch to a flash-style online softmax
    # over KV tiles (m/l/acc scratch) and a lax.fori_loop over heads to bound
    # live ranges; the full (L, L) per-head scores are fine at small L.
    heads = []
    for h in range(n_head):                                   # static unroll
        q = q_all[:, h * Dh:(h + 1) * Dh]
        k = k_all[:, h * Dh:(h + 1) * Dh]
        v = v_all[:, h * Dh:(h + 1) * Dh]
        s = _mm_nt(q, k)                                      # (L, L), f32
        s = s - jnp.max(s, axis=-1, keepdims=True)
        p = jnp.exp(s)
        p = p * pl.reciprocal(jnp.sum(p, axis=-1, keepdims=True), approx=True)
        heads.append(_mm(p, v))                               # (L, Dh)
    attn = jnp.concatenate(heads, axis=-1)                    # (L, E)
    x = x + _mm(attn, out_w_ref[...]) + out_b_ref[...]        # single K=E matmul

    # --- feed-forward sub-layer: x + W2 @ relu(W1 @ LN2(x) + b1) + b2 ---
    # TODO(synk): for large E * n_inner, K/N-tile the FFN weights on a trailing
    # "arbitrary" grid axis (f32 VMEM accumulator) to bound VMEM on v7x.
    ln2 = _layernorm(x, ln2_g_ref[...], ln2_b_ref[...], eps)
    ff = jnp.maximum(_mm(ln2, w1_ref[...]) + b1_ref[...], 0.0)
    x = x + _mm(ff, w2_ref[...]) + b2_ref[...]

    o_ref[0] = x.astype(o_ref.dtype)


# ------------------------------ host wrappers --------------------------------

def input_projection_pe(x, w, b, pe):
    """(B, L, Din) -> (B, L, E) = x @ w + b + pe[:L], row-tiled over (B, L/TL)."""
    B, L, Din = x.shape
    E = w.shape[1]
    TL = _seq_tile(L)
    return pl.pallas_call(
        _inproj_pe_kernel,
        out_shape=jax.ShapeDtypeStruct((B, L, E), jnp.float32),
        grid=(B, L // TL),
        in_specs=[
            pl.BlockSpec((1, TL, Din), lambda b_, i: (b_, i, 0)),
            _const_spec((Din, E)),
            _const_spec((1, E)),
            pl.BlockSpec((TL, E), lambda b_, i: (i, 0)),
        ],
        out_specs=pl.BlockSpec((1, TL, E), lambda b_, i: (b_, i, 0)),
        compiler_params=pltpu.CompilerParams(
            dimension_semantics=("parallel", "parallel"),
            vmem_limit_bytes=_vmem_limit_bytes()),
    )(x, w, b.reshape(1, E), pe)


def encoder_layer(h, layer, n_head, eps=_LN_EPS):
    """One fused pre-norm encoder layer; grid over batch ("parallel")."""
    B, L, E = h.shape
    Ninner = layer["ff1_w"].shape[1]
    kernel = functools.partial(_encoder_layer_kernel, n_head=n_head, eps=eps,
                               scale=1.0 / math.sqrt(E // n_head))
    return pl.pallas_call(
        kernel,
        out_shape=jax.ShapeDtypeStruct((B, L, E), jnp.float32),
        grid=(B,),
        in_specs=[
            pl.BlockSpec((1, L, E), lambda b_: (b_, 0, 0)),
            _const_spec((1, E)), _const_spec((1, E)),
            _const_spec((E, 3 * E)), _const_spec((1, 3 * E)),
            _const_spec((E, E)), _const_spec((1, E)),
            _const_spec((1, E)), _const_spec((1, E)),
            _const_spec((E, Ninner)), _const_spec((1, Ninner)),
            _const_spec((Ninner, E)), _const_spec((1, E)),
        ],
        out_specs=pl.BlockSpec((1, L, E), lambda b_: (b_, 0, 0)),
        compiler_params=pltpu.CompilerParams(
            dimension_semantics=("parallel",),
            vmem_limit_bytes=_vmem_limit_bytes()),
    )(h,
      layer["ln1_g"].reshape(1, E), layer["ln1_b"].reshape(1, E),
      layer["qkv_w"], layer["qkv_b"].reshape(1, 3 * E),
      layer["out_w"], layer["out_b"].reshape(1, E),
      layer["ln2_g"].reshape(1, E), layer["ln2_b"].reshape(1, E),
      layer["ff1_w"], layer["ff1_b"].reshape(1, Ninner),
      layer["ff2_w"], layer["ff2_b"].reshape(1, E))


# ----------------------------- model (glue in JAX) ---------------------------

def make_angular_pe(n_embd, n_positions):
    position = jnp.arange(n_positions, dtype=jnp.float32)[:, None]
    div_term = jnp.exp(jnp.arange(0, n_embd, 2, dtype=jnp.float32)
                       * (-math.log(10000.0) / n_embd))
    args = position * div_term
    pe = jnp.zeros((n_positions, n_embd), dtype=jnp.float32)
    pe = pe.at[:, 0::2].set(jnp.sin(args))
    pe = pe.at[:, 1::2].set(jnp.cos(args[:, :n_embd // 2]))   # safe for odd E
    return pe


def init_params(key, input_size, n_positions, n_embd, n_layer, n_head, n_inner):
    def w_init(k, shape, scale=0.02):
        return (scale * jax.random.normal(k, shape, dtype=jnp.float32)
                ).astype(_WEIGHT_DTYPE)

    def b_init(k, shape, scale=0.02):
        return scale * jax.random.normal(k, shape, dtype=jnp.float32)

    keys = jax.random.split(key, 2 + n_layer)
    params = {
        "n_embd": n_embd,
        "n_head": n_head,
        "pe": make_angular_pe(n_embd, n_positions),
        "in_proj_w": w_init(keys[0], (input_size, n_embd)),
        "in_proj_b": b_init(keys[1], (n_embd,)),
        "layers": [],
    }
    for li in range(n_layer):
        lk = jax.random.split(keys[2 + li], 8)
        params["layers"].append({
            "qkv_w": w_init(lk[0], (n_embd, 3 * n_embd)),
            "qkv_b": b_init(lk[1], (3 * n_embd,)),
            "out_w": w_init(lk[2], (n_embd, n_embd)),
            "out_b": b_init(lk[3], (n_embd,)),
            "ff1_w": w_init(lk[4], (n_embd, n_inner)),
            "ff1_b": b_init(lk[5], (n_inner,)),
            "ff2_w": w_init(lk[6], (n_inner, n_embd)),
            "ff2_b": b_init(lk[7], (n_embd,)),
            "ln1_g": jnp.ones((n_embd,), jnp.float32),
            "ln1_b": jnp.zeros((n_embd,), jnp.float32),
            "ln2_g": jnp.ones((n_embd,), jnp.float32),
            "ln2_b": jnp.zeros((n_embd,), jnp.float32),
        })
    return params


def simple_transformer_forward(params, x, timestamps=None):
    """x: (B, L, input_size) -> (outputs (B, L, n_embd), states=None).

    timestamps accepted for interface parity (unused for 'pos-angular').
    Dropout layers are identity (eval mode).
    """
    del timestamps
    L = x.shape[1]
    h = input_projection_pe(x, params["in_proj_w"], params["in_proj_b"],
                            params["pe"][:L])
    for layer in params["layers"]:
        h = encoder_layer(h, layer, params["n_head"])
    # TODO(synk): src_key_padding_mask / causal mask / return_states="full"
    # are not exercised here (all positions valid, causal=False, states=None).
    return h, None


# ------------------------ pure-JAX reference (f32) ---------------------------

def _reference_forward(params, x):
    f32 = lambda a: a.astype(jnp.float32)
    B, L, _ = x.shape
    E, H = params["n_embd"], params["n_head"]
    Dh = E // H
    h = x @ f32(params["in_proj_w"]) + params["in_proj_b"] + params["pe"][:L]
    for layer in params["layers"]:
        ln = _layernorm(h, layer["ln1_g"], layer["ln1_b"], _LN_EPS)
        qkv = ln @ f32(layer["qkv_w"]) + layer["qkv_b"]
        q, k, v = jnp.split(qkv, 3, axis=-1)
        q = q.reshape(B, L, H, Dh)
        k = k.reshape(B, L, H, Dh)
        v = v.reshape(B, L, H, Dh)
        s = jnp.einsum("blhd,bmhd->bhlm", q, k) / math.sqrt(Dh)
        p = jax.nn.softmax(s, axis=-1)
        attn = jnp.einsum("bhlm,bmhd->blhd", p, v).reshape(B, L, E)
        h = h + attn @ f32(layer["out_w"]) + layer["out_b"]
        ln2 = _layernorm(h, layer["ln2_g"], layer["ln2_b"], _LN_EPS)
        ff = jnp.maximum(ln2 @ f32(layer["ff1_w"]) + layer["ff1_b"], 0.0)
        h = h + ff @ f32(layer["ff2_w"]) + layer["ff2_b"]
    return h


# ---------------------------------- main --------------------------------------

if __name__ == "__main__":
    # small, module-consistent shapes
    B, L = 2, 8
    input_size = 16
    n_positions = 16
    n_embd = 32
    n_layer = 2
    n_head = 4
    n_inner = 64

    key = jax.random.PRNGKey(0)
    k_par, k_x, k_t = jax.random.split(key, 3)

    params = init_params(k_par, input_size, n_positions, n_embd,
                         n_layer, n_head, n_inner)
    x = jax.random.normal(k_x, (B, L, input_size), dtype=jnp.float32)
    timestamps = jnp.cumsum(
        jax.random.uniform(k_t, (B, L), dtype=jnp.float32), axis=1)

    outputs, states = simple_transformer_forward(params, x, timestamps)
    outputs = jax.block_until_ready(outputs)
    assert outputs.shape == (B, L, n_embd)
    assert states is None

    # bf16 MXU operands + approx-reciprocal softmax: small documented delta
    # vs the f32 reference (well under 1e-1 at these shapes/magnitudes).
    ref = jax.block_until_ready(_reference_forward(params, x))
    err = float(jnp.max(jnp.abs(outputs - ref)))
    assert err < 1e-1, f"max abs error vs f32 reference: {err}"

    print("KERNEL_OK")
</pallas_src>

<mosaic_0001>
module attributes {stable_mosaic.version = 11 : i64} {
  func.func @_inproj_pe_kernel(%arg0: i32, %arg1: i32, %arg2: memref<1x8x16xf32, #tpu.memory_space<vmem>>, %arg3: memref<16x32xbf16, #tpu.memory_space<vmem>>, %arg4: memref<1x32xf32, #tpu.memory_space<vmem>>, %arg5: memref<8x32xf32, #tpu.memory_space<vmem>>, %arg6: memref<1x8x32xf32, #tpu.memory_space<vmem>>) attributes {dimension_semantics = [#tpu.dimension_semantics<parallel>, #tpu.dimension_semantics<parallel>], iteration_bounds = array<i64: 2, 1>, scalar_prefetch = 0 : i64, scratch_operands = 0 : i64, tpu.core_type = #tpu.core_type<tc>, window_params = [{transform_indices = @transform_0, window_bounds = array<i64: 1, 8, 16>}, {pipeline_mode = #tpu.pipeline_mode<synchronous>, transform_indices = @transform_1, window_bounds = array<i64: 16, 32>}, {pipeline_mode = #tpu.pipeline_mode<synchronous>, transform_indices = @transform_2, window_bounds = array<i64: 1, 32>}, {transform_indices = @transform_3, window_bounds = array<i64: 8, 32>}, {transform_indices = @transform_4, window_bounds = array<i64: 1, 8, 32>}]} {
    %c0 = arith.constant 0 : index
    %c0_0 = arith.constant 0 : index
    %c0_1 = arith.constant 0 : index
    %0 = vector.load %arg2[%c0, %c0_0, %c0_1] : memref<1x8x16xf32, #tpu.memory_space<vmem>>, vector<1x8x16xf32>
    %1 = vector.shape_cast %0 : vector<1x8x16xf32> to vector<8x16xf32>
    %c0_2 = arith.constant 0 : index
    %c0_3 = arith.constant 0 : index
    %2 = vector.load %arg3[%c0_2, %c0_3] : memref<16x32xbf16, #tpu.memory_space<vmem>>, vector<16x32xbf16>
    %3 = arith.truncf %1 : vector<8x16xf32> to vector<8x16xbf16>
    %cst = arith.constant dense<0.000000e+00> : vector<8x32xf32>
    %4 = tpu.matmul %3, %2, %cst {dimension_numbers = #tpu.dot_dimension_numbers<[1], [0], [0], [1], [0, 0, 1, 1], [], []>} : vector<8x16xbf16>, vector<16x32xbf16>, vector<8x32xf32> -> vector<8x32xf32>
    %c0_4 = arith.constant 0 : index
    %c0_5 = arith.constant 0 : index
    %5 = vector.load %arg4[%c0_4, %c0_5] : memref<1x32xf32, #tpu.memory_space<vmem>>, vector<1x32xf32>
    %6 = vector.broadcast %5 : vector<1x32xf32> to vector<8x32xf32>
    %7 = arith.addf %4, %6 : vector<8x32xf32>
    %c0_6 = arith.constant 0 : index
    %c0_7 = arith.constant 0 : index
    %8 = vector.load %arg5[%c0_6, %c0_7] : memref<8x32xf32, #tpu.memory_space<vmem>>, vector<8x32xf32>
    %9 = arith.addf %7, %8 : vector<8x32xf32>
    %c0_8 = arith.constant 0 : index
    %c0_9 = arith.constant 0 : index
    %c0_10 = arith.constant 0 : index
    %10 = vector.load %arg6[%c0_8, %c0_9, %c0_10] : memref<1x8x32xf32, #tpu.memory_space<vmem>>, vector<1x8x32xf32>
    %11 = vector.shape_cast %10 : vector<1x8x32xf32> to vector<8x32xf32>
    %12 = vector.shape_cast %9 : vector<8x32xf32> to vector<1x8x32xf32>
    tpu.vector_store %arg6[%c0_8, %c0_9, %c0_10], %12 {strides = array<i32>} : memref<1x8x32xf32, #tpu.memory_space<vmem>>, vector<1x8x32xf32>,
    return
  }
  func.func @transform_0(%arg0: i32, %arg1: i32) -> (i32, i32, i32) {
    %c0_i32 = arith.constant 0 : i32
    %c0_i32_0 = arith.constant 0 : i32
    return %arg0, %arg1, %c0_i32 : i32, i32, i32
  }
  func.func @transform_1(%arg0: i32, %arg1: i32) -> (i32, i32) {
    %c0_i32 = arith.constant 0 : i32
    %c0_i32_0 = arith.constant 0 : i32
    %c0_i32_1 = arith.constant 0 : i32
    return %c0_i32, %c0_i32_0 : i32, i32
  }
  func.func @transform_2(%arg0: i32, %arg1: i32) -> (i32, i32) {
    %c0_i32 = arith.constant 0 : i32
    %c0_i32_0 = arith.constant 0 : i32
    %c0_i32_1 = arith.constant 0 : i32
    return %c0_i32, %c0_i32_0 : i32, i32
  }
  func.func @transform_3(%arg0: i32, %arg1: i32) -> (i32, i32) {
    %c0_i32 = arith.constant 0 : i32
    %c0_i32_0 = arith.constant 0 : i32
    return %arg1, %c0_i32 : i32, i32
  }
  func.func @transform_4(%arg0: i32, %arg1: i32) -> (i32, i32, i32) {
    %c0_i32 = arith.constant 0 : i32
    %c0_i32_0 = arith.constant 0 : i32
    return %arg0, %arg1, %c0_i32 : i32, i32, i32
  }
}

</mosaic_0001>

<llo_original>
// kernel: tpu_custom_call.1
$region0: #{tpu_custom_call.1}
  #allocation0 [shape = 'u32[]', space=smem, size = 0x4, offset = 0x4, fixed_abs, tag = 'smem constant byte address 0x4 - core index']
  #allocation1 [shape = 'u32[72,128]{1,0:T(1,128)}', space=vmem, size = 0x9000, scoped, tag = 'internal scratch']
  %s0 = inlined_call_operand.hbm [shape: f32[2,8,16], index: 0, kind: input, shape index: {}]
  %s1 = inlined_call_operand.hbm [shape: bf16[16,32], index: 1, kind: input, shape index: {}]
  %s2 = inlined_call_operand.vmem [shape: f32[1,32], index: 2, kind: input, shape index: {}]
  %s3 = inlined_call_operand.hbm [shape: f32[8,32], index: 3, kind: input, shape index: {}]
  %s4 = inlined_call_operand.hbm [shape: f32[2,8,32], index: 4, kind: output, shape index: {}]
  %s5 = sld [smem:[#allocation0]]
  $region61: #{tpu_custom_call.1} parent=0
    _
  %s7 = ssub.s32 1, %s5
  %s8 = scalar_select 0, %s7, %s5
  $region1: #{tpu_custom_call.1} parent=0
    #allocation2 [shape = 'u8[8192]{0}', space=vmem, size = 0x2000, scoped, tag = 'input window, operand 0']
    #allocation3 [shape = 's32[2]{0}', space=sflag, size = 0x8, scoped, tag = 'scoped memory for tpu_custom_call.1']
    #allocation4 [shape = 's32[2]{0}', space=sflag, size = 0x8, scoped, tag = 'scoped memory for tpu_custom_call.1']
    #allocation5 [shape = 'u8[4096]{0}', space=vmem, size = 0x1000, scoped, tag = 'input window, operand 1, single buffered']
    #allocation6 [shape = 's32[1]{0}', space=sflag, size = 0x4, scoped, tag = 'scoped memory for tpu_custom_call.1']
    #allocation7 [shape = 'u8[4096]{0}', space=vmem, size = 0x1000, scoped, tag = 'input window, operand 3, single buffered']
    #allocation8 [shape = 'u8[8192]{0}', space=vmem, size = 0x2000, scoped, tag = 'output window, operand 0']
    %9 = vsyncpa [#allocation3], 0
    %s10 = scalar_lea.sflag [#allocation3], 1
    %11 = vsyncpa %s10, 0
    %12 = vsyncpa [#allocation6], 0
    %13 = vsyncpa [#allocation4], 0
    %s14 = scalar_lea.sflag [#allocation4], 1
    %15 = vsyncpa %s14, 0
    loop: start=0, step=1, limit=4
    $region2: #{tpu_custom_call.1} parent=1 // loop_pre_header
      _
    $region3: #{tpu_custom_call.1} parent=1 // loop_header
      %s17 = sphi 0, %s21
      %p18 = scmp.ge.s32.totalorder %s17, 4
      %s24 = sphi 0, %s36
      %s25 = sphi 0, %s32
      %s26 = sphi 0, %s24
      %s27 = sphi 0, %s25
      %s28 = sphi 0, %s26
      %s29 = sphi 0, %s27
      %s41 = sphi 0, %s43
      %s44 = sphi 0, %s41
      %s45 = sphi 0, %s44
      %s61 = sphi 0, %s45
      %s65 = sphi 0, %s65
      %s67 = sphi 0, %s65
      %s68 = sphi 0, %s67
      %s82 = sphi 0, %s68
      %s86 = sphi 0, %s86
      %s88 = sphi 0, %s86
      %s89 = sphi 0, %s88
      %s103 = sphi 0, %s89
      %s109 = sphi 0, %s111
      %s112 = sphi 0, %s109
      %s113 = sphi 0, %s112
      %s129 = sphi 0, %s113
      %s137 = sphi 0, %s139
      %s140 = sphi 0, %s137
      %s141 = sphi 0, %s140
      %s157 = sphi 0, %s141
    $region4: #{tpu_custom_call.1} parent=1 // loop_header_branch
      %20 = sbr.rel (%p18) target = $region8
    $region5: #{tpu_custom_call.1} parent=1 // loop_body
      %s22 = ssub.s32 %s17, 1
      %s23 = ssub.s32 %s17, 2
      %s30 = sadd.s32 1, %s25
      %p31 = scmp.ge.s32.totalorder %s30, 1
      %s32 = scalar_select %p31, 0, %s30
      %s33 = sadd.s32 1, %s24
      %s34 = scalar_select %p31, %s33, %s24
      %p35 = scmp.ge.s32.totalorder %s34, 2
      %s36 = scalar_select %p35, 0, %s34
      %s37 = ssub.s32 %s24, %s36
      %s38 = ssub.s32 %s25, %s32
      %s39 = sor.u32 %s37, %s38
      %p40 = scmp.eq.s32.totalorder %s39, 0
      %s42 = sadd.s32 %s41, 1
      %s43 = scalar_select %p40, %s41, %s42
      %p46 = pneg %p40
      %p47 = scmp.eq.s32.totalorder %s17, 1
      %p48 = por %p46, %p47
      %p49 = scmp.ne.s32.totalorder %s41, %s44
      %p50 = scmp.eq.s32.totalorder %s17, 0
      %p51 = por %p49, %p50
      %p52 = scmp.ne.s32.totalorder %s41, %s44
      %p53 = scmp.eq.s32.totalorder %s22, 1
      %p54 = por %p52, %p53
      %p55 = scmp.ne.s32.totalorder %s44, %s45
      %p56 = scmp.eq.s32.totalorder %s22, 0
      %p57 = por %p55, %p56
      %p58 = scmp.ne.s32.totalorder %s44, %s45
      %p59 = scmp.eq.s32.totalorder %s23, 1
      %p60 = por %p58, %p59
      %p62 = scmp.ne.s32.totalorder %s45, %s61
      %p63 = scmp.eq.s32.totalorder %s23, 0
      %p64 = por %p62, %p63
      %s66 = sadd.s32 %s65, 1
      %p69 = scmp.eq.s32.totalorder %s17, 1
      %p70 = scmp.ne.s32.totalorder %s65, %s67
      %p71 = scmp.eq.s32.totalorder %s17, 0
      %p72 = por %p70, %p71
      %p73 = scmp.ne.s32.totalorder %s65, %s67
      %p74 = scmp.eq.s32.totalorder %s22, 1
      %p75 = por %p73, %p74
      %p76 = scmp.ne.s32.totalorder %s67, %s68
      %p77 = scmp.eq.s32.totalorder %s22, 0
      %p78 = por %p76, %p77
      %p79 = scmp.ne.s32.totalorder %s67, %s68
      %p80 = scmp.eq.s32.totalorder %s23, 1
      %p81 = por %p79, %p80
      %p83 = scmp.ne.s32.totalorder %s68, %s82
      %p84 = scmp.eq.s32.totalorder %s23, 0
      %p85 = por %p83, %p84
      %s87 = sadd.s32 %s86, 1
      %p90 = scmp.eq.s32.totalorder %s17, 1
      %p91 = scmp.ne.s32.totalorder %s86, %s88
      %p92 = scmp.eq.s32.totalorder %s17, 0
      %p93 = por %p91, %p92
      %p94 = scmp.ne.s32.totalorder %s86, %s88
      %p95 = scmp.eq.s32.totalorder %s22, 1
      %p96 = por %p94, %p95
      %p97 = scmp.ne.s32.totalorder %s88, %s89
      %p98 = scmp.eq.s32.totalorder %s22, 0
      %p99 = por %p97, %p98
      %p100 = scmp.ne.s32.totalorder %s88, %s89
      %p101 = scmp.eq.s32.totalorder %s23, 1
      %p102 = por %p100, %p101
      %p104 = scmp.ne.s32.totalorder %s89, %s103
      %p105 = scmp.eq.s32.totalorder %s23, 0
      %p106 = por %p104, %p105
      %s107 = ssub.s32 %s25, %s32
      %p108 = scmp.eq.s32.totalorder %s107, 0
      %s110 = sadd.s32 %s109, 1
      %s111 = scalar_select %p108, %s109, %s110
      %p114 = pneg %p108
      %p115 = scmp.eq.s32.totalorder %s17, 1
      %p116 = por %p114, %p115
      %p117 = scmp.ne.s32.totalorder %s109, %s112
      %p118 = scmp.eq.s32.totalorder %s17, 0
      %p119 = por %p117, %p118
      %p120 = scmp.ne.s32.totalorder %s109, %s112
      %p121 = scmp.eq.s32.totalorder %s22, 1
      %p122 = por %p120, %p121
      %p123 = scmp.ne.s32.totalorder %s112, %s113
      %p124 = scmp.eq.s32.totalorder %s22, 0
      %p125 = por %p123, %p124
      %p126 = scmp.ne.s32.totalorder %s112, %s113
      %p127 = scmp.eq.s32.totalorder %s23, 1
      %p128 = por %p126, %p127
      %p130 = scmp.ne.s32.totalorder %s113, %s129
      %p131 = scmp.eq.s32.totalorder %s23, 0
      %p132 = por %p130, %p131
      %s133 = ssub.s32 %s24, %s36
      %s134 = ssub.s32 %s25, %s32
      %s135 = sor.u32 %s133, %s134
      %p136 = scmp.eq.s32.totalorder %s135, 0
      %s138 = sadd.s32 %s137, 1
      %s139 = scalar_select %p136, %s137, %s138
      %p142 = pneg %p136
      %p143 = scmp.eq.s32.totalorder %s17, 1
      %p144 = por %p142, %p143
      %p145 = scmp.ne.s32.totalorder %s137, %s140
      %p146 = scmp.eq.s32.totalorder %s17, 0
      %p147 = por %p145, %p146
      %p148 = scmp.ne.s32.totalorder %s137, %s140
      %p149 = scmp.eq.s32.totalorder %s22, 1
      %p150 = por %p148, %p149
      %p151 = scmp.ne.s32.totalorder %s140, %s141
      %p152 = scmp.eq.s32.totalorder %s22, 0
      %p153 = por %p151, %p152
      %p154 = scmp.ne.s32.totalorder %s140, %s141
      %p155 = scmp.eq.s32.totalorder %s23, 1
      %p156 = por %p154, %p155
      %p158 = scmp.ne.s32.totalorder %s141, %s157
      %p159 = scmp.eq.s32.totalorder %s23, 0
      %p160 = por %p158, %p159
      %p161 = scmp.le.s32.totalorder 1, %s17
      %p162 = scmp.lt.s32.totalorder %s17, 3
      %p163 = pnand %p161, %p162
      %p164 = pneg %p163
      // Predicated region
      $region9: #{tpu_custom_call.1} parent=5 // pred_check
        _
      $region10: #{tpu_custom_call.1} parent=5 // pred_check_branch
        %166 = sbr.rel (%p163) target = $region12
      $region11: #{tpu_custom_call.1} parent=5 // pred_region
        %s167 = ssub.s32 %s17, 1
        // Predicated region
        $region13: #{tpu_custom_call.1} parent=11 // pred_check
          %p168 = pneg %p78
        $region14: #{tpu_custom_call.1} parent=11 // pred_check_branch
          %170 = sbr.rel (%p168) target = $region16
        $region15: #{tpu_custom_call.1} parent=11 // pred_region
          %172 = vsyncadd [#allocation6], 0
          %s173 = sshll.u32 %s1, 4
          %s174 = int_to_ptr.hbm [resolvable:$true] %s173
          %s175 = sshll.u32 [#allocation5], 4
          %s176 = int_to_ptr.vmem [resolvable:$true] %s175
          %181 = dma.hbm_to_vmem [thread:$0]  %s174, 128, %s176, [#allocation6], 64, 64, 4
        $region16: #{tpu_custom_call.1} parent=11 // pred_fallthru
          _
        // Predicated region
        $region17: #{tpu_custom_call.1} parent=11 // pred_check
          %p182 = pneg %p99
        $region18: #{tpu_custom_call.1} parent=11 // pred_check_branch
          %184 = sbr.rel (%p182) target = $region20
        $region19: #{tpu_custom_call.1} parent=11 // pred_region
          _
        $region20: #{tpu_custom_call.1} parent=11 // pred_fallthru
          _
        // Predicated region
        $region21: #{tpu_custom_call.1} parent=11 // pred_check
          %p185 = pneg %p125
        $region22: #{tpu_custom_call.1} parent=11 // pred_check_branch
          %187 = sbr.rel (%p185) target = $region24
        $region23: #{tpu_custom_call.1} parent=11 // pred_region
          %189 = vsyncadd [#allocation6], 0
          %s190 = smul.addr %s27, 8
          %s191 = scalar_lea.hbm %s3, %s190
          %s193 = sshll.u32 %s191, 4
          %s194 = int_to_ptr.hbm [resolvable:$true] %s193
          %s195 = sshll.u32 [#allocation7], 4
          %s196 = int_to_ptr.vmem [resolvable:$true] %s195
          %198 = dma.hbm_to_vmem [thread:$0]  %s194, 128, %s196, [#allocation6]
        $region24: #{tpu_custom_call.1} parent=11 // pred_fallthru
          _
      $region12: #{tpu_custom_call.1} parent=5 // pred_fallthru
        _
      %p199 = scmp.lt.s32.totalorder %s17, 2
      // Predicated region
      $region25: #{tpu_custom_call.1} parent=5 // pred_check
        %p200 = pneg %p199
      $region26: #{tpu_custom_call.1} parent=5 // pred_check_branch
        %202 = sbr.rel (%p200) target = $region28
      $region27: #{tpu_custom_call.1} parent=5 // pred_region
        // Predicated region
        $region29: #{tpu_custom_call.1} parent=27 // pred_check
          %p203 = pneg %p51
        $region30: #{tpu_custom_call.1} parent=27 // pred_check_branch
          %205 = sbr.rel (%p203) target = $region32
        $region31: #{tpu_custom_call.1} parent=27 // pred_region
          %s206 = sand.u32 %s41, 1
          %s207 = scalar_lea.sflag [#allocation3], %s206
          %s208 = sand.u32 %s41, 1
          %s209 = smul.addr %s208, 8
          %s210 = scalar_lea.vmem [#allocation2], %s209
          %212 = vsyncadd %s207, 0
          %s213 = sadd.s32 %s25, %s24
          %s214 = smul.addr %s213, 8
          %s215 = scalar_lea.hbm %s0, %s214
          %s217 = sshll.u32 %s215, 4
          %s218 = int_to_ptr.hbm [resolvable:$true] %s217
          %s219 = sshll.u32 %s210, 4
          %s220 = int_to_ptr.vmem [resolvable:$true] %s219
          %222 = dma.hbm_to_vmem [thread:$0]  %s218, 128, %s220, %s207
        $region32: #{tpu_custom_call.1} parent=27 // pred_fallthru
          _
      $region28: #{tpu_custom_call.1} parent=5 // pred_fallthru
        _
      %p223 = scmp.le.s32.totalorder 1, %s17
      %p224 = scmp.lt.s32.totalorder %s17, 3
      %p225 = pnand %p223, %p224
      %p226 = pneg %p225
      // Predicated region
      $region33: #{tpu_custom_call.1} parent=5 // pred_check
        _
      $region34: #{tpu_custom_call.1} parent=5 // pred_check_branch
        %228 = sbr.rel (%p225) target = $region36
      $region35: #{tpu_custom_call.1} parent=5 // pred_region
        %s229 = ssub.s32 %s17, 1
        %s230 = sand.u32 %s44, 1
        %s231 = scalar_lea.sflag [#allocation3], %s230
        %s232 = sand.u32 %s44, 1
        %s233 = smul.addr %s232, 8
        %s234 = scalar_lea.vmem [#allocation2], %s233
        // Predicated region
        $region37: #{tpu_custom_call.1} parent=35 // pred_check
          %p235 = pneg %p57
        $region38: #{tpu_custom_call.1} parent=35 // pred_check_branch
          %237 = sbr.rel (%p235) target = $region40
        $region39: #{tpu_custom_call.1} parent=35 // pred_region
          %239 = dma.done %s231, 128
        $region40: #{tpu_custom_call.1} parent=35 // pred_fallthru
          _
        // Predicated region
        $region41: #{tpu_custom_call.1} parent=35 // pred_check
          %p240 = pneg %p78
        $region42: #{tpu_custom_call.1} parent=35 // pred_check_branch
          %242 = sbr.rel (%p240) target = $region44
        $region43: #{tpu_custom_call.1} parent=35 // pred_region
          %244 = dma.done [#allocation6], 128
        $region44: #{tpu_custom_call.1} parent=35 // pred_fallthru
          _
        // Predicated region
        $region45: #{tpu_custom_call.1} parent=35 // pred_check
          %p245 = pneg %p125
        $region46: #{tpu_custom_call.1} parent=35 // pred_check_branch
          %247 = sbr.rel (%p245) target = $region48
        $region47: #{tpu_custom_call.1} parent=35 // pred_region
          %249 = dma.done [#allocation6], 128
        $region48: #{tpu_custom_call.1} parent=35 // pred_fallthru
          _
        %s250 = sand.u32 %s44, 1
        %s251 = scalar_lea.sflag [#allocation3], %s250
        %s252 = sand.u32 %s44, 1
        %s253 = smul.addr %s252, 8
        %s254 = scalar_lea.vmem [#allocation2], %s253
        %p255 = pneg %p57
        %p256 = pneg %p54
        %p257 = pneg %p78
        %p258 = pneg %p75
        %p259 = pneg %p99
        %p260 = pneg %p96
        %p261 = pneg %p125
        %p262 = pneg %p122
        %p263 = pneg %p153
        %p264 = pneg %p150
        %s265 = sand.u32 %s140, 1
        %s266 = scalar_lea.sflag [#allocation4], %s265
        %s267 = sand.u32 %s140, 1
        %s268 = smul.addr %s267, 8
        %s269 = scalar_lea.vmem [#allocation8], %s268
        %v271 = vld [vmem:[%s234] sm:$0xff]
        %v272 = vld [vmem:[#allocation5] sm:$0xf]
        %v273 = vld [vmem:[#allocation5 + $0x4] sm:$0xf]
        %v274 = vpack.c.bf16 %v271, %v271
        %v275 = vld [vmem:[%s2] sm:$0x1]
        %v277 = vperm.slane %v275, 0
        %v281 = vunpack.c.l.b16 %v272
        %v282 = vunpack.c.l.b16 %v273
        %v283 = vpack.c.b16 %v282, %v281
        %vm285 = vcmask 130048
        %v287 = vsel %vm285, %v274, 0
        %289 = vmatpush.bf16.msra.mxu0 0
        %290 = vmatpush.bf16.msra.mxu0 0
        %291 = vmatpush.bf16.msra.mxu0 0
        %292 = vmatpush.bf16.msra.mxu0 0
        %293 = vmatpush.bf16.msra.mxu0 0
        %294 = vmatpush.bf16.msra.mxu0 0
        %295 = vmatpush.bf16.msra.mxu0 0
        %296 = vmatpush.bf16.msra.mxu0 %v283
        %297 = vmatmul.bf16.gmra.mxu0 %v287
        %v298 = vpop.f32.mrf.mxu0
        %v299 = vadd.f32 %v277, %v298
        %v300 = vpop.f32.mrf.mxu0
        %301 = vdwg.mxu0
        %v302 = vld [vmem:[#allocation7] sm:$0xff]
        %v303 = vadd.f32 %v299, %v302
        %vm304 = vcmask 261120
        %305 = vst.msk [vmem:[%s269] sm:$0xff] %vm304, %v303
        %s306 = sand.u32 %s140, 1
        %s307 = scalar_lea.sflag [#allocation4], %s306
        %s308 = sand.u32 %s140, 1
        %s309 = smul.addr %s308, 8
        %s310 = scalar_lea.vmem [#allocation8], %s309
        // Predicated region
        $region49: #{tpu_custom_call.1} parent=35 // pred_check
          %p311 = pneg %p150
        $region50: #{tpu_custom_call.1} parent=35 // pred_check_branch
          %313 = sbr.rel (%p311) target = $region52
        $region51: #{tpu_custom_call.1} parent=35 // pred_region
          %315 = vsyncadd %s307, 0
          %s316 = sadd.s32 %s27, %s26
          %s317 = smul.addr %s316, 8
          %s318 = scalar_lea.hbm %s4, %s317
          %s320 = sshll.u32 %s310, 4
          %s321 = int_to_ptr.vmem [resolvable:$true] %s320
          %s322 = sshll.u32 %s318, 4
          %s323 = int_to_ptr.hbm [resolvable:$true] %s322
          %325 = dma.vmem_to_hbm [thread:$0]  %s321, 128, %s323, %s307
        $region52: #{tpu_custom_call.1} parent=35 // pred_fallthru
          _
      $region36: #{tpu_custom_call.1} parent=5 // pred_fallthru
        _
      %p326 = scmp.le.s32.totalorder 2, %s17
      // Predicated region
      $region53: #{tpu_custom_call.1} parent=5 // pred_check
        %p327 = pneg %p326
      $region54: #{tpu_custom_call.1} parent=5 // pred_check_branch
        %329 = sbr.rel (%p327) target = $region56
      $region55: #{tpu_custom_call.1} parent=5 // pred_region
        %s330 = ssub.s32 %s17, 2
        // Predicated region
        $region57: #{tpu_custom_call.1} parent=55 // pred_check
          %p331 = pneg %p156
        $region58: #{tpu_custom_call.1} parent=55 // pred_check_branch
          %333 = sbr.rel (%p331) target = $region60
        $region59: #{tpu_custom_call.1} parent=55 // pred_region
          %s334 = sand.u32 %s141, 1
          %s335 = scalar_lea.sflag [#allocation4], %s334
          %s336 = sand.u32 %s141, 1
          %s337 = smul.addr %s336, 8
          %s338 = scalar_lea.vmem [#allocation8], %s337
          %340 = dma.done %s335, 128
        $region60: #{tpu_custom_call.1} parent=55 // pred_fallthru
          _
      $region56: #{tpu_custom_call.1} parent=5 // pred_fallthru
        _
    $region6: #{tpu_custom_call.1} parent=1 // loop_footer
      %s21 = sadd.s32 1, %s17
    $region7: #{tpu_custom_call.1} parent=1 // loop_footer_branch
      %16 = sbr.rel target = $region3
    $region8: #{tpu_custom_call.1} parent=1 // loop_exit
      _
    %341 = vsyncpa [#allocation3], 1
    %s342 = scalar_lea.sflag [#allocation3], 1
    %343 = vsyncpa %s342, 1
    %344 = vsyncpa [#allocation6], 1
    %345 = vsyncpa [#allocation4], 1
    %s346 = scalar_lea.sflag [#allocation4], 1
    %347 = vsyncpa %s346, 1

</llo_original>
